<compile_context>
chip_gen: v7x
topology: tpu7x:2x2x1
jax: 0.10.0
libtpu: 0.0.40
codegen_flags: <defaults>
</compile_context>

<pallas_src>
import functools
import math

import jax
import jax.numpy as jnp
from jax.experimental import pallas as pl
from jax.experimental.pallas import tpu as pltpu


# ----------------------------------------------------------------------------
# Fused BlockGen kernel (whole chain + residual in one pass over a row tile)
# ----------------------------------------------------------------------------
def _blockgen_kernel(x_ref, win_ref, w01_ref, b01_ref, wout_ref, bout_ref,
                     o_ref, *, in_channels, hidden):
    # ---- Conv-in (1x1, K = in_channels) -------------------------------------
    x = x_ref[...]
    win = win_ref[...]
    if in_channels <= 8:
        # Tiny K: unrolled VPU broadcast-FMAs in f32 (skips a nearly-empty MXU
        # push with a lane-sparse operand).
        h = x[:, 0:1] * win[0:1, :]
        for c in range(1, in_channels):
            h = h + x[:, c:c + 1] * win[c:c + 1, :]
    else:
        h = jnp.dot(x.astype(jnp.bfloat16), win.astype(jnp.bfloat16),
                    preferred_element_type=jnp.float32)

    # ---- Residual branches: one fused lane-dense matmul (N = 2*hidden) ------
    # Norm affine and the Conv-in bias are pre-folded into w01/b01 on the host.
    z = jnp.dot(h.astype(jnp.bfloat16), w01_ref[...],
                preferred_element_type=jnp.float32) + b01_ref[...]
    r0 = jnp.maximum(z[:, :hidden], 0.0)   # Conv -> Norm (folded) -> LIF surrogate
    r1 = z[:, hidden:]                     # Conv branch
    y = r0 + r1                            # Residual: sum of branches

    # ---- Conv-out (1x1) ------------------------------------------------------
    out = jnp.dot(y.astype(jnp.bfloat16), wout_ref[...],
                  preferred_element_type=jnp.float32) + bout_ref[...]
    o_ref[...] = out.astype(o_ref.dtype)


def _pick_tm(rows, tm_request):
    """Row-tile choice: big (>= 512 requested) for production row counts, but
    shrink so there are at least ~4 grid steps (>= 2 per v7x TensorCore) so
    the BlockSpec pipeline has DMA/compute overlap to exploit."""
    rows8 = max(8, ((rows + 7) // 8) * 8)
    tm = max(8, min((tm_request // 8) * 8, rows8))
    while tm > 64 and pl.cdiv(rows, tm) < 4:
        tm //= 2
    return tm


def _prepare_params(params):
    """Host-side folding (in production, do once per weight update, not per step).

    * Norm (frozen per-channel affine) folded into the branch-0 conv.
    * Both branch convs concatenated -> single [hidden, 2*hidden] matmul.
    * Conv-in bias folded into the branch biases (exact: linear, pre-ReLU).
    * MXU-facing weights cast to bf16; biases and Conv-in weight stay f32.
    """
    w0_eff = params["w0"] * params["gamma"]                    # [hid, hid]
    b0_eff = params["b0"] * params["gamma"] + params["beta"]   # [1, hid]
    w01 = jnp.concatenate([w0_eff, params["w1"]], axis=1)      # [hid, 2*hid] f32
    b01 = jnp.concatenate([b0_eff, params["b1"]], axis=1)      # [1, 2*hid]
    b01 = b01 + jnp.dot(params["bin"], w01)                    # fold Conv-in bias (f32)
    return (params["win"].astype(jnp.float32),
            w01.astype(jnp.bfloat16),
            b01.astype(jnp.float32),
            params["wout"].astype(jnp.bfloat16),
            params["bout"].astype(jnp.float32))


# ----------------------------------------------------------------------------
# NHWC fast path: no wrapper-side transposes (use this across chained blocks)
# ----------------------------------------------------------------------------
def blockgen_forward_nhwc(x_nhwc, params, state=None, *, tm=512):
    """BlockGen.forward on NHWC activations: [B,H,W,C] -> ([B,H,W,out_ch], state)."""
    B, H, W, C = x_nhwc.shape
    rows = B * H * W
    win, w01, b01, wout, bout = _prepare_params(params)
    hidden = win.shape[1]
    out_ch = wout.shape[1]

    x_flat = x_nhwc.reshape(rows, C)

    tm = _pick_tm(rows, tm)
    rows_pad = pl.cdiv(rows, tm) * tm
    if rows_pad != rows:                       # only for ragged row counts
        x_flat = jnp.pad(x_flat, ((0, rows_pad - rows), (0, 0)))

    const = lambda i: (0, 0)                   # weights/biases: same block every tile
    kernel = functools.partial(_blockgen_kernel, in_channels=C, hidden=hidden)

    # (If hidden/tm grow on v7x's 64 MiB VMEM, consider pipeline_mode=
    #  pl.Buffered(1) on the constant weight specs and vmem_limit_bytes.)
    out = pl.pallas_call(
        kernel,
        out_shape=jax.ShapeDtypeStruct((rows_pad, out_ch), x_nhwc.dtype),
        grid=(rows_pad // tm,),
        in_specs=[
            pl.BlockSpec((tm, C), lambda i: (i, 0)),        # x row tile
            pl.BlockSpec((C, hidden), const),               # Win          (f32)
            pl.BlockSpec((hidden, 2 * hidden), const),      # [W0' | W1]   (bf16)
            pl.BlockSpec((1, 2 * hidden), const),           # [b0'' | b1'] (f32)
            pl.BlockSpec((hidden, out_ch), const),          # Wout         (bf16)
            pl.BlockSpec((1, out_ch), const),               # bout         (f32)
        ],
        out_specs=pl.BlockSpec((tm, out_ch), lambda i: (i, 0)),
        compiler_params=pltpu.CompilerParams(
            dimension_semantics=("parallel",)),
    )(x_flat, win, w01, b01, wout, bout)

    y = out[:rows].reshape(B, H, W, out_ch)

    # Mirror BlockGen.forward state plumbing: one top-level branch with three
    # layers (Conv-in, Residual sub-block, Conv-out) -- all stateless here.
    # TODO(synk): real LIF carries membrane-potential state; ReLU surrogate used.
    if state is None:
        state = [[None, None, None]]
    return y, state


# ----------------------------------------------------------------------------
# PyTorch-signature entry point (NCHW in / NCHW out)
# ----------------------------------------------------------------------------
def blockgen_forward(x_nchw, params, state=None, *, tm=512):
    """BlockGen.forward: x [B, C, H, W] -> (y [B, out_channels, H, W], state).

    Note: at production sizes keep activations NHWC across blocks and call
    `blockgen_forward_nhwc` directly; the two transposes below are each a full
    extra HBM pass over the activation tensor.
    """
    x_nhwc = jnp.transpose(x_nchw, (0, 2, 3, 1))
    y_nhwc, state = blockgen_forward_nhwc(x_nhwc, params, state, tm=tm)
    return jnp.transpose(y_nhwc, (0, 3, 1, 2)), state


# ----------------------------------------------------------------------------
# Pure-JAX reference (un-fused, un-folded, f32 HIGHEST) for correctness check
# ----------------------------------------------------------------------------
def blockgen_ref(x_nchw, params):
    B, C, H, W = x_nchw.shape
    hp = jax.lax.Precision.HIGHEST
    x = jnp.transpose(x_nchw, (0, 2, 3, 1)).reshape(-1, C)
    h = jnp.dot(x, params["win"], precision=hp) + params["bin"]
    r0 = jnp.dot(h, params["w0"], precision=hp) + params["b0"]
    r0 = jnp.maximum(r0 * params["gamma"] + params["beta"], 0.0)
    r1 = jnp.dot(h, params["w1"], precision=hp) + params["b1"]
    y = jnp.dot(r0 + r1, params["wout"], precision=hp) + params["bout"]
    out_ch = params["wout"].shape[1]
    return jnp.transpose(y.reshape(B, H, W, out_ch), (0, 3, 1, 2))


# ----------------------------------------------------------------------------
# Parameter init (kaiming-style 1x1 conv weights, non-trivial Norm affine so
# the host-side folds are actually exercised)
# ----------------------------------------------------------------------------
def init_blockgen_params(key, in_channels, hidden=128, out_channels=128):
    ks = jax.random.split(key, 8)

    def kaiming(k, fan_in, shape):
        return jax.random.normal(k, shape, jnp.float32) * math.sqrt(2.0 / fan_in)

    return dict(
        win=kaiming(ks[0], in_channels, (in_channels, hidden)),
        bin=0.1 * jax.random.normal(ks[1], (1, hidden), jnp.float32),
        w0=kaiming(ks[2], hidden, (hidden, hidden)),
        b0=0.1 * jax.random.normal(ks[3], (1, hidden), jnp.float32),
        gamma=1.0 + 0.1 * jax.random.normal(ks[4], (1, hidden), jnp.float32),
        beta=0.1 * jax.random.normal(ks[5], (1, hidden), jnp.float32),
        w1=kaiming(ks[6], hidden, (hidden, hidden)),
        b1=jnp.zeros((1, hidden), jnp.float32),
        wout=kaiming(ks[7], hidden, (hidden, out_channels)),
        bout=jnp.zeros((1, out_channels), jnp.float32),
    )


if __name__ == "__main__":
    key = jax.random.PRNGKey(0)
    B, C, H, W = 2, 4, 16, 16      # input feature map [batch, channel, h, w]
    hidden = 128                   # BlockGen.out_channels for this cfg

    params = init_blockgen_params(jax.random.fold_in(key, 1), C,
                                  hidden=hidden, out_channels=hidden)
    x = jax.random.normal(jax.random.fold_in(key, 2), (B, C, H, W), jnp.float32)

    y, state = jax.jit(blockgen_forward)(x, params)
    jax.block_until_ready(y)

    assert y.shape == (B, hidden, H, W)
    assert len(state) == 1 and len(state[0]) == 3

    y_ref = blockgen_ref(x, params)
    err = float(jnp.max(jnp.abs(y - y_ref)))
    scale = float(jnp.max(jnp.abs(y_ref))) + 1.0
    # bf16 MXU operands (f32 accumulate) -> slightly looser tolerance than f32.
    assert err < 3e-2 * scale, f"max abs err {err} vs scale {scale}"

    print("KERNEL_OK")
</pallas_src>

<mosaic_0001>
module attributes {stable_mosaic.version = 11 : i64} {
  func.func @_blockgen_kernel(%arg0: i32, %arg1: memref<128x4xf32, #tpu.memory_space<vmem>>, %arg2: memref<4x128xf32, #tpu.memory_space<vmem>>, %arg3: memref<128x256xbf16, #tpu.memory_space<vmem>>, %arg4: memref<1x256xf32, #tpu.memory_space<vmem>>, %arg5: memref<128x128xbf16, #tpu.memory_space<vmem>>, %arg6: memref<1x128xf32, #tpu.memory_space<vmem>>, %arg7: memref<128x128xf32, #tpu.memory_space<vmem>>) attributes {dimension_semantics = [#tpu.dimension_semantics<parallel>], iteration_bounds = array<i64: 4>, scalar_prefetch = 0 : i64, scratch_operands = 0 : i64, tpu.core_type = #tpu.core_type<tc>, window_params = [{transform_indices = @transform_0, window_bounds = array<i64: 128, 4>}, {pipeline_mode = #tpu.pipeline_mode<synchronous>, transform_indices = @transform_1, window_bounds = array<i64: 4, 128>}, {pipeline_mode = #tpu.pipeline_mode<synchronous>, transform_indices = @transform_2, window_bounds = array<i64: 128, 256>}, {pipeline_mode = #tpu.pipeline_mode<synchronous>, transform_indices = @transform_3, window_bounds = array<i64: 1, 256>}, {pipeline_mode = #tpu.pipeline_mode<synchronous>, transform_indices = @transform_4, window_bounds = array<i64: 128, 128>}, {pipeline_mode = #tpu.pipeline_mode<synchronous>, transform_indices = @transform_5, window_bounds = array<i64: 1, 128>}, {transform_indices = @transform_6, window_bounds = array<i64: 128, 128>}]} {
    %c0 = arith.constant 0 : index
    %c0_0 = arith.constant 0 : index
    %0 = vector.load %arg1[%c0, %c0_0] : memref<128x4xf32, #tpu.memory_space<vmem>>, vector<128x4xf32>
    %c0_1 = arith.constant 0 : index
    %c0_2 = arith.constant 0 : index
    %1 = vector.load %arg2[%c0_1, %c0_2] : memref<4x128xf32, #tpu.memory_space<vmem>>, vector<4x128xf32>
    %2 = vector.extract_strided_slice %0 {offsets = [0, 0], sizes = [128, 1], strides = [1, 1]} : vector<128x4xf32> to vector<128x1xf32>
    %3 = vector.extract_strided_slice %1 {offsets = [0, 0], sizes = [1, 128], strides = [1, 1]} : vector<4x128xf32> to vector<1x128xf32>
    %4 = vector.broadcast %2 : vector<128x1xf32> to vector<128x128xf32>
    %5 = vector.broadcast %3 : vector<1x128xf32> to vector<128x128xf32>
    %6 = arith.mulf %4, %5 : vector<128x128xf32>
    %7 = vector.extract_strided_slice %0 {offsets = [0, 1], sizes = [128, 1], strides = [1, 1]} : vector<128x4xf32> to vector<128x1xf32>
    %8 = vector.extract_strided_slice %1 {offsets = [1, 0], sizes = [1, 128], strides = [1, 1]} : vector<4x128xf32> to vector<1x128xf32>
    %9 = vector.broadcast %7 : vector<128x1xf32> to vector<128x128xf32>
    %10 = vector.broadcast %8 : vector<1x128xf32> to vector<128x128xf32>
    %11 = arith.mulf %9, %10 : vector<128x128xf32>
    %12 = arith.addf %6, %11 : vector<128x128xf32>
    %13 = vector.extract_strided_slice %0 {offsets = [0, 2], sizes = [128, 1], strides = [1, 1]} : vector<128x4xf32> to vector<128x1xf32>
    %14 = vector.extract_strided_slice %1 {offsets = [2, 0], sizes = [1, 128], strides = [1, 1]} : vector<4x128xf32> to vector<1x128xf32>
    %15 = vector.broadcast %13 : vector<128x1xf32> to vector<128x128xf32>
    %16 = vector.broadcast %14 : vector<1x128xf32> to vector<128x128xf32>
    %17 = arith.mulf %15, %16 : vector<128x128xf32>
    %18 = arith.addf %12, %17 : vector<128x128xf32>
    %19 = vector.extract_strided_slice %0 {offsets = [0, 3], sizes = [128, 1], strides = [1, 1]} : vector<128x4xf32> to vector<128x1xf32>
    %20 = vector.extract_strided_slice %1 {offsets = [3, 0], sizes = [1, 128], strides = [1, 1]} : vector<4x128xf32> to vector<1x128xf32>
    %21 = vector.broadcast %19 : vector<128x1xf32> to vector<128x128xf32>
    %22 = vector.broadcast %20 : vector<1x128xf32> to vector<128x128xf32>
    %23 = arith.mulf %21, %22 : vector<128x128xf32>
    %24 = arith.addf %18, %23 : vector<128x128xf32>
    %25 = arith.truncf %24 : vector<128x128xf32> to vector<128x128xbf16>
    %c0_3 = arith.constant 0 : index
    %c0_4 = arith.constant 0 : index
    %26 = vector.load %arg3[%c0_3, %c0_4] : memref<128x256xbf16, #tpu.memory_space<vmem>>, vector<128x256xbf16>
    %cst = arith.constant dense<0.000000e+00> : vector<128x256xf32>
    %27 = tpu.matmul %25, %26, %cst {dimension_numbers = #tpu.dot_dimension_numbers<[1], [0], [0], [1], [0, 0, 1, 1], [], []>} : vector<128x128xbf16>, vector<128x256xbf16>, vector<128x256xf32> -> vector<128x256xf32>
    %c0_5 = arith.constant 0 : index
    %c0_6 = arith.constant 0 : index
    %28 = vector.load %arg4[%c0_5, %c0_6] : memref<1x256xf32, #tpu.memory_space<vmem>>, vector<1x256xf32>
    %29 = vector.broadcast %28 : vector<1x256xf32> to vector<128x256xf32>
    %30 = arith.addf %27, %29 : vector<128x256xf32>
    %31 = vector.extract_strided_slice %30 {offsets = [0, 0], sizes = [128, 128], strides = [1, 1]} : vector<128x256xf32> to vector<128x128xf32>
    %cst_7 = arith.constant 0.000000e+00 : f32
    %32 = vector.broadcast %cst_7 : f32 to vector<128x128xf32>
    %33 = arith.maximumf %31, %32 : vector<128x128xf32>
    %34 = vector.extract_strided_slice %30 {offsets = [0, 128], sizes = [128, 128], strides = [1, 1]} : vector<128x256xf32> to vector<128x128xf32>
    %35 = arith.addf %33, %34 : vector<128x128xf32>
    %36 = arith.truncf %35 : vector<128x128xf32> to vector<128x128xbf16>
    %c0_8 = arith.constant 0 : index
    %c0_9 = arith.constant 0 : index
    %37 = vector.load %arg5[%c0_8, %c0_9] : memref<128x128xbf16, #tpu.memory_space<vmem>>, vector<128x128xbf16>
    %cst_10 = arith.constant dense<0.000000e+00> : vector<128x128xf32>
    %38 = tpu.matmul %36, %37, %cst_10 {dimension_numbers = #tpu.dot_dimension_numbers<[1], [0], [0], [1], [0, 0, 1, 1], [], []>} : vector<128x128xbf16>, vector<128x128xbf16>, vector<128x128xf32> -> vector<128x128xf32>
    %c0_11 = arith.constant 0 : index
    %c0_12 = arith.constant 0 : index
    %39 = vector.load %arg6[%c0_11, %c0_12] : memref<1x128xf32, #tpu.memory_space<vmem>>, vector<1x128xf32>
    %40 = vector.broadcast %39 : vector<1x128xf32> to vector<128x128xf32>
    %41 = arith.addf %38, %40 : vector<128x128xf32>
    %c0_13 = arith.constant 0 : index
    %c0_14 = arith.constant 0 : index
    %42 = vector.load %arg7[%c0_13, %c0_14] : memref<128x128xf32, #tpu.memory_space<vmem>>, vector<128x128xf32>
    tpu.vector_store %arg7[%c0_13, %c0_14], %41 {strides = array<i32>} : memref<128x128xf32, #tpu.memory_space<vmem>>, vector<128x128xf32>,
    return
  }
  func.func @transform_0(%arg0: i32) -> (i32, i32) {
    %c0_i32 = arith.constant 0 : i32
    %c0_i32_0 = arith.constant 0 : i32
    return %arg0, %c0_i32 : i32, i32
  }
  func.func @transform_1(%arg0: i32) -> (i32, i32) {
    %c0_i32 = arith.constant 0 : i32
    %c0_i32_0 = arith.constant 0 : i32
    %c0_i32_1 = arith.constant 0 : i32
    return %c0_i32, %c0_i32_0 : i32, i32
  }
  func.func @transform_2(%arg0: i32) -> (i32, i32) {
    %c0_i32 = arith.constant 0 : i32
    %c0_i32_0 = arith.constant 0 : i32
    %c0_i32_1 = arith.constant 0 : i32
    return %c0_i32, %c0_i32_0 : i32, i32
  }
  func.func @transform_3(%arg0: i32) -> (i32, i32) {
    %c0_i32 = arith.constant 0 : i32
    %c0_i32_0 = arith.constant 0 : i32
    %c0_i32_1 = arith.constant 0 : i32
    return %c0_i32, %c0_i32_0 : i32, i32
  }
  func.func @transform_4(%arg0: i32) -> (i32, i32) {
    %c0_i32 = arith.constant 0 : i32
    %c0_i32_0 = arith.constant 0 : i32
    %c0_i32_1 = arith.constant 0 : i32
    return %c0_i32, %c0_i32_0 : i32, i32
  }
  func.func @transform_5(%arg0: i32) -> (i32, i32) {
    %c0_i32 = arith.constant 0 : i32
    %c0_i32_0 = arith.constant 0 : i32
    %c0_i32_1 = arith.constant 0 : i32
    return %c0_i32, %c0_i32_0 : i32, i32
  }
  func.func @transform_6(%arg0: i32) -> (i32, i32) {
    %c0_i32 = arith.constant 0 : i32
    %c0_i32_0 = arith.constant 0 : i32
    return %arg0, %c0_i32 : i32, i32
  }
}

</mosaic_0001>

<llo_original>
// kernel: blockgen_forward.1
$region0: #{blockgen_forward.1}
  #allocation0 [shape = 'u32[]', space=smem, size = 0x4, offset = 0x4, fixed_abs, tag = 'smem constant byte address 0x4 - core index']
  #allocation1 [shape = 'u32[144,128]{1,0:T(1,128)}', space=vmem, size = 0x12000, scoped, tag = 'internal scratch']
  %s0 = inlined_call_operand.vmem [shape: f32[512,4], index: 0, kind: input, shape index: {}]
  %s1 = inlined_call_operand.vmem [shape: f32[4,128], index: 1, kind: input, shape index: {}]
  %s2 = inlined_call_operand.vmem [shape: bf16[128,256], index: 2, kind: input, shape index: {}]
  %s3 = inlined_call_operand.vmem [shape: f32[1,256], index: 3, kind: input, shape index: {}]
  %s4 = inlined_call_operand.vmem [shape: bf16[128,128], index: 4, kind: input, shape index: {}]
  %s5 = inlined_call_operand.vmem [shape: f32[1,128], index: 5, kind: input, shape index: {}]
  %s6 = inlined_call_operand.hbm [shape: f32[512,128], index: 6, kind: output, shape index: {}]
  %s7 = sld [smem:[#allocation0]]
  $region57: #{blockgen_forward.1} parent=0
    _
  %s9 = ssub.s32 1, %s7
  %s10 = scalar_select 0, %s9, %s7
  $region1: #{blockgen_forward.1} parent=0
    #allocation2 [shape = 'u8[131072]{0}', space=vmem, size = 0x20000, scoped, tag = 'output window, operand 0']
    #allocation3 [shape = 's32[2]{0}', space=sflag, size = 0x8, scoped, tag = 'scoped memory for blockgen_forward.1']
    %11 = vsyncpa [#allocation3], 0
    %s12 = scalar_lea.sflag [#allocation3], 1
    %13 = vsyncpa %s12, 0
    loop: start=0, step=1, limit=6
    $region2: #{blockgen_forward.1} parent=1 // loop_pre_header
      _
    $region3: #{blockgen_forward.1} parent=1 // loop_header
      %s15 = sphi 0, %s19
      %p16 = scmp.ge.s32.totalorder %s15, 6
      %s25 = sphi 0, %s27
      %s28 = sphi 0, %s25
      %s29 = sphi 0, %s28
      %s45 = sphi 0, %s29
      %s49 = sphi 0, %s49
      %s51 = sphi 0, %s49
      %s52 = sphi 0, %s51
      %s66 = sphi 0, %s52
      %s70 = sphi 0, %s70
      %s72 = sphi 0, %s70
      %s73 = sphi 0, %s72
      %s87 = sphi 0, %s73
      %s91 = sphi 0, %s91
      %s93 = sphi 0, %s91
      %s94 = sphi 0, %s93
      %s108 = sphi 0, %s94
      %s112 = sphi 0, %s112
      %s114 = sphi 0, %s112
      %s115 = sphi 0, %s114
      %s129 = sphi 0, %s115
      %s133 = sphi 0, %s133
      %s135 = sphi 0, %s133
      %s136 = sphi 0, %s135
      %s150 = sphi 0, %s136
      %s156 = sphi 0, %s158
      %s159 = sphi 0, %s156
      %s160 = sphi 0, %s159
      %s176 = sphi 0, %s160
    $region4: #{blockgen_forward.1} parent=1 // loop_header_branch
      %18 = sbr.rel (%p16) target = $region8
    $region5: #{blockgen_forward.1} parent=1 // loop_body
      %s20 = ssub.s32 %s15, 1
      %s21 = ssub.s32 %s15, 2
      %s22 = sadd.s32 %s15, 1
      %s23 = ssub.s32 %s15, %s22
      %p24 = scmp.eq.s32.totalorder %s23, 0
      %s26 = sadd.s32 %s25, 1
      %s27 = scalar_select %p24, %s25, %s26
      %p30 = pneg %p24
      %p31 = scmp.eq.s32.totalorder %s15, 3
      %p32 = por %p30, %p31
      %p33 = scmp.ne.s32.totalorder %s25, %s28
      %p34 = scmp.eq.s32.totalorder %s15, 0
      %p35 = por %p33, %p34
      %p36 = scmp.ne.s32.totalorder %s25, %s28
      %p37 = scmp.eq.s32.totalorder %s20, 3
      %p38 = por %p36, %p37
      %p39 = scmp.ne.s32.totalorder %s28, %s29
      %p40 = scmp.eq.s32.totalorder %s20, 0
      %p41 = por %p39, %p40
      %p42 = scmp.ne.s32.totalorder %s28, %s29
      %p43 = scmp.eq.s32.totalorder %s21, 3
      %p44 = por %p42, %p43
      %p46 = scmp.ne.s32.totalorder %s29, %s45
      %p47 = scmp.eq.s32.totalorder %s21, 0
      %p48 = por %p46, %p47
      %s50 = sadd.s32 %s49, 1
      %p53 = scmp.eq.s32.totalorder %s15, 3
      %p54 = scmp.ne.s32.totalorder %s49, %s51
      %p55 = scmp.eq.s32.totalorder %s15, 0
      %p56 = por %p54, %p55
      %p57 = scmp.ne.s32.totalorder %s49, %s51
      %p58 = scmp.eq.s32.totalorder %s20, 3
      %p59 = por %p57, %p58
      %p60 = scmp.ne.s32.totalorder %s51, %s52
      %p61 = scmp.eq.s32.totalorder %s20, 0
      %p62 = por %p60, %p61
      %p63 = scmp.ne.s32.totalorder %s51, %s52
      %p64 = scmp.eq.s32.totalorder %s21, 3
      %p65 = por %p63, %p64
      %p67 = scmp.ne.s32.totalorder %s52, %s66
      %p68 = scmp.eq.s32.totalorder %s21, 0
      %p69 = por %p67, %p68
      %s71 = sadd.s32 %s70, 1
      %p74 = scmp.eq.s32.totalorder %s15, 3
      %p75 = scmp.ne.s32.totalorder %s70, %s72
      %p76 = scmp.eq.s32.totalorder %s15, 0
      %p77 = por %p75, %p76
      %p78 = scmp.ne.s32.totalorder %s70, %s72
      %p79 = scmp.eq.s32.totalorder %s20, 3
      %p80 = por %p78, %p79
      %p81 = scmp.ne.s32.totalorder %s72, %s73
      %p82 = scmp.eq.s32.totalorder %s20, 0
      %p83 = por %p81, %p82
      %p84 = scmp.ne.s32.totalorder %s72, %s73
      %p85 = scmp.eq.s32.totalorder %s21, 3
      %p86 = por %p84, %p85
      %p88 = scmp.ne.s32.totalorder %s73, %s87
      %p89 = scmp.eq.s32.totalorder %s21, 0
      %p90 = por %p88, %p89
      %s92 = sadd.s32 %s91, 1
      %p95 = scmp.eq.s32.totalorder %s15, 3
      %p96 = scmp.ne.s32.totalorder %s91, %s93
      %p97 = scmp.eq.s32.totalorder %s15, 0
      %p98 = por %p96, %p97
      %p99 = scmp.ne.s32.totalorder %s91, %s93
      %p100 = scmp.eq.s32.totalorder %s20, 3
      %p101 = por %p99, %p100
      %p102 = scmp.ne.s32.totalorder %s93, %s94
      %p103 = scmp.eq.s32.totalorder %s20, 0
      %p104 = por %p102, %p103
      %p105 = scmp.ne.s32.totalorder %s93, %s94
      %p106 = scmp.eq.s32.totalorder %s21, 3
      %p107 = por %p105, %p106
      %p109 = scmp.ne.s32.totalorder %s94, %s108
      %p110 = scmp.eq.s32.totalorder %s21, 0
      %p111 = por %p109, %p110
      %s113 = sadd.s32 %s112, 1
      %p116 = scmp.eq.s32.totalorder %s15, 3
      %p117 = scmp.ne.s32.totalorder %s112, %s114
      %p118 = scmp.eq.s32.totalorder %s15, 0
      %p119 = por %p117, %p118
      %p120 = scmp.ne.s32.totalorder %s112, %s114
      %p121 = scmp.eq.s32.totalorder %s20, 3
      %p122 = por %p120, %p121
      %p123 = scmp.ne.s32.totalorder %s114, %s115
      %p124 = scmp.eq.s32.totalorder %s20, 0
      %p125 = por %p123, %p124
      %p126 = scmp.ne.s32.totalorder %s114, %s115
      %p127 = scmp.eq.s32.totalorder %s21, 3
      %p128 = por %p126, %p127
      %p130 = scmp.ne.s32.totalorder %s115, %s129
      %p131 = scmp.eq.s32.totalorder %s21, 0
      %p132 = por %p130, %p131
      %s134 = sadd.s32 %s133, 1
      %p137 = scmp.eq.s32.totalorder %s15, 3
      %p138 = scmp.ne.s32.totalorder %s133, %s135
      %p139 = scmp.eq.s32.totalorder %s15, 0
      %p140 = por %p138, %p139
      %p141 = scmp.ne.s32.totalorder %s133, %s135
      %p142 = scmp.eq.s32.totalorder %s20, 3
      %p143 = por %p141, %p142
      %p144 = scmp.ne.s32.totalorder %s135, %s136
      %p145 = scmp.eq.s32.totalorder %s20, 0
      %p146 = por %p144, %p145
      %p147 = scmp.ne.s32.totalorder %s135, %s136
      %p148 = scmp.eq.s32.totalorder %s21, 3
      %p149 = por %p147, %p148
      %p151 = scmp.ne.s32.totalorder %s136, %s150
      %p152 = scmp.eq.s32.totalorder %s21, 0
      %p153 = por %p151, %p152
      %s154 = ssub.s32 %s15, %s22
      %p155 = scmp.eq.s32.totalorder %s154, 0
      %s157 = sadd.s32 %s156, 1
      %s158 = scalar_select %p155, %s156, %s157
      %p161 = pneg %p155
      %p162 = scmp.eq.s32.totalorder %s15, 3
      %p163 = por %p161, %p162
      %p164 = scmp.ne.s32.totalorder %s156, %s159
      %p165 = scmp.eq.s32.totalorder %s15, 0
      %p166 = por %p164, %p165
      %p167 = scmp.ne.s32.totalorder %s156, %s159
      %p168 = scmp.eq.s32.totalorder %s20, 3
      %p169 = por %p167, %p168
      %p170 = scmp.ne.s32.totalorder %s159, %s160
      %p171 = scmp.eq.s32.totalorder %s20, 0
      %p172 = por %p170, %p171
      %p173 = scmp.ne.s32.totalorder %s159, %s160
      %p174 = scmp.eq.s32.totalorder %s21, 3
      %p175 = por %p173, %p174
      %p177 = scmp.ne.s32.totalorder %s160, %s176
      %p178 = scmp.eq.s32.totalorder %s21, 0
      %p179 = por %p177, %p178
      %p180 = scmp.le.s32.totalorder 1, %s15
      %p181 = scmp.lt.s32.totalorder %s15, 5
      %p182 = pnand %p180, %p181
      %p183 = pneg %p182
      // Predicated region
      $region9: #{blockgen_forward.1} parent=5 // pred_check
        _
      $region10: #{blockgen_forward.1} parent=5 // pred_check_branch
        %185 = sbr.rel (%p182) target = $region12
      $region11: #{blockgen_forward.1} parent=5 // pred_region
        %s186 = ssub.s32 %s15, 1
        // Predicated region
        $region13: #{blockgen_forward.1} parent=11 // pred_check
          %p187 = pneg %p62
        $region14: #{blockgen_forward.1} parent=11 // pred_check_branch
          %189 = sbr.rel (%p187) target = $region16
        $region15: #{blockgen_forward.1} parent=11 // pred_region
          _
        $region16: #{blockgen_forward.1} parent=11 // pred_fallthru
          _
        // Predicated region
        $region17: #{blockgen_forward.1} parent=11 // pred_check
          %p190 = pneg %p83
        $region18: #{blockgen_forward.1} parent=11 // pred_check_branch
          %192 = sbr.rel (%p190) target = $region20
        $region19: #{blockgen_forward.1} parent=11 // pred_region
          _
        $region20: #{blockgen_forward.1} parent=11 // pred_fallthru
          _
        // Predicated region
        $region21: #{blockgen_forward.1} parent=11 // pred_check
          %p193 = pneg %p104
        $region22: #{blockgen_forward.1} parent=11 // pred_check_branch
          %195 = sbr.rel (%p193) target = $region24
        $region23: #{blockgen_forward.1} parent=11 // pred_region
          _
        $region24: #{blockgen_forward.1} parent=11 // pred_fallthru
          _
        // Predicated region
        $region25: #{blockgen_forward.1} parent=11 // pred_check
          %p196 = pneg %p125
        $region26: #{blockgen_forward.1} parent=11 // pred_check_branch
          %198 = sbr.rel (%p196) target = $region28
        $region27: #{blockgen_forward.1} parent=11 // pred_region
          _
        $region28: #{blockgen_forward.1} parent=11 // pred_fallthru
          _
        // Predicated region
        $region29: #{blockgen_forward.1} parent=11 // pred_check
          %p199 = pneg %p146
        $region30: #{blockgen_forward.1} parent=11 // pred_check_branch
          %201 = sbr.rel (%p199) target = $region32
        $region31: #{blockgen_forward.1} parent=11 // pred_region
          _
        $region32: #{blockgen_forward.1} parent=11 // pred_fallthru
          _
      $region12: #{blockgen_forward.1} parent=5 // pred_fallthru
        _
      %p202 = scmp.lt.s32.totalorder %s15, 4
      // Predicated region
      $region33: #{blockgen_forward.1} parent=5 // pred_check
        %p203 = pneg %p202
      $region34: #{blockgen_forward.1} parent=5 // pred_check_branch
        %205 = sbr.rel (%p203) target = $region36
      $region35: #{blockgen_forward.1} parent=5 // pred_region
        // Predicated region
        $region37: #{blockgen_forward.1} parent=35 // pred_check
          %p206 = pneg %p35
        $region38: #{blockgen_forward.1} parent=35 // pred_check_branch
          %208 = sbr.rel (%p206) target = $region40
        $region39: #{blockgen_forward.1} parent=35 // pred_region
          %s209 = smul.u32 16, %s15
          %p210 = scmp.lt.s32.totalorder %s209, 63
          %s211 = scalar_select %p210, %s209, 63
          %s212 = smul.addr %s211, 8
          %s213 = scalar_lea.vmem %s0, %s212
          %s214 = smul.u32 16, %s15
        $region40: #{blockgen_forward.1} parent=35 // pred_fallthru
          _
      $region36: #{blockgen_forward.1} parent=5 // pred_fallthru
        _
      %p215 = scmp.le.s32.totalorder 1, %s15
      %p216 = scmp.lt.s32.totalorder %s15, 5
      %p217 = pnand %p215, %p216
      %p218 = pneg %p217
      // Predicated region
      $region41: #{blockgen_forward.1} parent=5 // pred_check
        _
      $region42: #{blockgen_forward.1} parent=5 // pred_check_branch
        %220 = sbr.rel (%p217) target = $region44
      $region43: #{blockgen_forward.1} parent=5 // pred_region
        %s221 = ssub.s32 %s15, 1
        %s222 = smul.u32 16, %s20
        %p223 = scmp.lt.s32.totalorder %s222, 63
        %s224 = scalar_select %p223, %s222, 63
        %s225 = smul.addr %s224, 8
        %s226 = scalar_lea.vmem %s0, %s225
        %p227 = pneg %p41
        %p228 = pneg %p38
        %p229 = pneg %p62
        %p230 = pneg %p59
        %p231 = pneg %p83
        %p232 = pneg %p80
        %p233 = pneg %p104
        %p234 = pneg %p101
        %p235 = pneg %p125
        %p236 = pneg %p122
        %p237 = pneg %p146
        %p238 = pneg %p143
        %p239 = pneg %p172
        %p240 = pneg %p169
        %s241 = sand.u32 %s159, 1
        %s242 = scalar_lea.sflag [#allocation3], %s241
        %s243 = sand.u32 %s159, 1
        %s244 = smul.addr %s243, 128
        %s245 = scalar_lea.vmem [#allocation2], %s244
        %s246 = smul.u32 16, %s20
        %p247 = scmp.lt.s32.totalorder %s246, 63
        %s248 = scalar_select %p247, %s246, 63
        %s249 = smul.addr %s248, 8
        %s250 = scalar_lea.vmem %s0, %s249
        %s251 = smul.u32 16, %s20
        %s252 = smul.u32 16, %s20
        %v254 = vld [vmem:[%s250] sm:$0xff]
        %v255 = vld [vmem:[%s250 + $0x8] sm:$0xff]
        %v256 = vld [vmem:[%s250 + $0x10] sm:$0xff]
        %v257 = vld [vmem:[%s250 + $0x18] sm:$0xff]
        %v258 = vld [vmem:[%s250 + $0x20] sm:$0xff]
        %v259 = vld [vmem:[%s250 + $0x28] sm:$0xff]
        %v260 = vld [vmem:[%s250 + $0x30] sm:$0xff]
        %v261 = vld [vmem:[%s250 + $0x38] sm:$0xff]
        %v262 = vld [vmem:[%s250 + $0x40] sm:$0xff]
        %v263 = vld [vmem:[%s250 + $0x48] sm:$0xff]
        %v264 = vld [vmem:[%s250 + $0x50] sm:$0xff]
        %v265 = vld [vmem:[%s250 + $0x58] sm:$0xff]
        %v266 = vld [vmem:[%s250 + $0x60] sm:$0xff]
        %v267 = vld [vmem:[%s250 + $0x68] sm:$0xff]
        %v268 = vld [vmem:[%s250 + $0x70] sm:$0xff]
        %v269 = vld [vmem:[%s250 + $0x78] sm:$0xff]
        %v270 = vld [vmem:[%s1] sm:$0xf]
        %272 = vset.pattern.permute.xlu0 0
        %273 = vperm.xlu0 %272, %v254
        %v274 = vpop.permute.xlu0 %273
        %277 = vset.pattern.permute.xlu0 0
        %278 = vperm.xlu0 %277, %v255
        %v279 = vpop.permute.xlu0 %278
        %282 = vset.pattern.permute.xlu0 0
        %283 = vperm.xlu0 %282, %v256
        %v284 = vpop.permute.xlu0 %283
        %287 = vset.pattern.permute.xlu0 0
        %288 = vperm.xlu0 %287, %v257
        %v289 = vpop.permute.xlu0 %288
        %292 = vset.pattern.permute.xlu0 0
        %293 = vperm.xlu0 %292, %v258
        %v294 = vpop.permute.xlu0 %293
        %297 = vset.pattern.permute.xlu0 0
        %298 = vperm.xlu0 %297, %v259
        %v299 = vpop.permute.xlu0 %298
        %302 = vset.pattern.permute.xlu0 0
        %303 = vperm.xlu0 %302, %v260
        %v304 = vpop.permute.xlu0 %303
        %307 = vset.pattern.permute.xlu0 0
        %308 = vperm.xlu0 %307, %v261
        %v309 = vpop.permute.xlu0 %308
        %312 = vset.pattern.permute.xlu0 0
        %313 = vperm.xlu0 %312, %v262
        %v314 = vpop.permute.xlu0 %313
        %317 = vset.pattern.permute.xlu0 0
        %318 = vperm.xlu0 %317, %v263
        %v319 = vpop.permute.xlu0 %318
        %322 = vset.pattern.permute.xlu0 0
        %323 = vperm.xlu0 %322, %v264
        %v324 = vpop.permute.xlu0 %323
        %327 = vset.pattern.permute.xlu0 0
        %328 = vperm.xlu0 %327, %v265
        %v329 = vpop.permute.xlu0 %328
        %332 = vset.pattern.permute.xlu0 0
        %333 = vperm.xlu0 %332, %v266
        %v334 = vpop.permute.xlu0 %333
        %337 = vset.pattern.permute.xlu0 0
        %338 = vperm.xlu0 %337, %v267
        %v339 = vpop.permute.xlu0 %338
        %342 = vset.pattern.permute.xlu0 0
        %343 = vperm.xlu0 %342, %v268
        %v344 = vpop.permute.xlu0 %343
        %347 = vset.pattern.permute.xlu0 0
        %348 = vperm.xlu0 %347, %v269
        %v349 = vpop.permute.xlu0 %348
        %v351 = vlaneseq
        %v352 = vshrl.u32 %v351, 7
        %v353 = vsub.s32 0, %v352
        %v354 = vrot.slane %v270, %v353
        %v355 = vmul.f32 %v274, %v354
        %v356 = vmul.f32 %v279, %v354
        %v357 = vmul.f32 %v284, %v354
        %v358 = vmul.f32 %v289, %v354
        %v359 = vmul.f32 %v294, %v354
        %v360 = vmul.f32 %v299, %v354
        %v361 = vmul.f32 %v304, %v354
        %v362 = vmul.f32 %v309, %v354
        %v363 = vmul.f32 %v314, %v354
        %v364 = vmul.f32 %v319, %v354
        %v365 = vmul.f32 %v324, %v354
        %v366 = vmul.f32 %v329, %v354
        %v367 = vmul.f32 %v334, %v354
        %v368 = vmul.f32 %v339, %v354
        %v369 = vmul.f32 %v344, %v354
        %v370 = vmul.f32 %v349, %v354
        %371 = vset.pattern.permute.xlu0 1
        %372 = vperm.xlu0 %371, %v254
        %v373 = vpop.permute.xlu0 %372
        %375 = vset.pattern.permute.xlu0 1
        %376 = vperm.xlu0 %375, %v255
        %v377 = vpop.permute.xlu0 %376
        %379 = vset.pattern.permute.xlu0 1
        %380 = vperm.xlu0 %379, %v256
        %v381 = vpop.permute.xlu0 %380
        %383 = vset.pattern.permute.xlu0 1
        %384 = vperm.xlu0 %383, %v257
        %v385 = vpop.permute.xlu0 %384
        %387 = vset.pattern.permute.xlu0 1
        %388 = vperm.xlu0 %387, %v258
        %v389 = vpop.permute.xlu0 %388
        %391 = vset.pattern.permute.xlu0 1
        %392 = vperm.xlu0 %391, %v259
        %v393 = vpop.permute.xlu0 %392
        %395 = vset.pattern.permute.xlu0 1
        %396 = vperm.xlu0 %395, %v260
        %v397 = vpop.permute.xlu0 %396
        %399 = vset.pattern.permute.xlu0 1
        %400 = vperm.xlu0 %399, %v261
        %v401 = vpop.permute.xlu0 %400
        %403 = vset.pattern.permute.xlu0 1
        %404 = vperm.xlu0 %403, %v262
        %v405 = vpop.permute.xlu0 %404
        %407 = vset.pattern.permute.xlu0 1
        %408 = vperm.xlu0 %407, %v263
        %v409 = vpop.permute.xlu0 %408
        %411 = vset.pattern.permute.xlu0 1
        %412 = vperm.xlu0 %411, %v264
        %v413 = vpop.permute.xlu0 %412
        %415 = vset.pattern.permute.xlu0 1
        %416 = vperm.xlu0 %415, %v265
        %v417 = vpop.permute.xlu0 %416
        %419 = vset.pattern.permute.xlu0 1
        %420 = vperm.xlu0 %419, %v266
        %v421 = vpop.permute.xlu0 %420
        %423 = vset.pattern.permute.xlu0 1
        %424 = vperm.xlu0 %423, %v267
        %v425 = vpop.permute.xlu0 %424
        %427 = vset.pattern.permute.xlu0 1
        %428 = vperm.xlu0 %427, %v268
        %v429 = vpop.permute.xlu0 %428
        %431 = vset.pattern.permute.xlu0 1
        %432 = vperm.xlu0 %431, %v269
        %v433 = vpop.permute.xlu0 %432
        %v435 = vlaneseq
        %v436 = vshrl.u32 %v435, 7
        %v437 = vsub.s32 1, %v436
        %v438 = vrot.slane %v270, %v437
        %v439 = vmul.f32 %v373, %v438
        %v440 = vmul.f32 %v377, %v438
        %v441 = vmul.f32 %v381, %v438
        %v442 = vmul.f32 %v385, %v438
        %v443 = vmul.f32 %v389, %v438
        %v444 = vmul.f32 %v393, %v438
        %v445 = vmul.f32 %v397, %v438
        %v446 = vmul.f32 %v401, %v438
        %v447 = vmul.f32 %v405, %v438
        %v448 = vmul.f32 %v409, %v438
        %v449 = vmul.f32 %v413, %v438
        %v450 = vmul.f32 %v417, %v438
        %v451 = vmul.f32 %v421, %v438
        %v452 = vmul.f32 %v425, %v438
        %v453 = vmul.f32 %v429, %v438
        %v454 = vmul.f32 %v433, %v438
        %v455 = vadd.f32 %v355, %v439
        %v456 = vadd.f32 %v356, %v440
        %v457 = vadd.f32 %v357, %v441
        %v458 = vadd.f32 %v358, %v442
        %v459 = vadd.f32 %v359, %v443
        %v460 = vadd.f32 %v360, %v444
        %v461 = vadd.f32 %v361, %v445
        %v462 = vadd.f32 %v362, %v446
        %v463 = vadd.f32 %v363, %v447
        %v464 = vadd.f32 %v364, %v448
        %v465 = vadd.f32 %v365, %v449
        %v466 = vadd.f32 %v366, %v450
        %v467 = vadd.f32 %v367, %v451
        %v468 = vadd.f32 %v368, %v452
        %v469 = vadd.f32 %v369, %v453
        %v470 = vadd.f32 %v370, %v454
        %471 = vset.pattern.permute.xlu0 2
        %472 = vperm.xlu0 %471, %v254
        %v473 = vpop.permute.xlu0 %472
        %475 = vset.pattern.permute.xlu0 2
        %476 = vperm.xlu0 %475, %v255
        %v477 = vpop.permute.xlu0 %476
        %479 = vset.pattern.permute.xlu0 2
        %480 = vperm.xlu0 %479, %v256
        %v481 = vpop.permute.xlu0 %480
        %483 = vset.pattern.permute.xlu0 2
        %484 = vperm.xlu0 %483, %v257
        %v485 = vpop.permute.xlu0 %484
        %487 = vset.pattern.permute.xlu0 2
        %488 = vperm.xlu0 %487, %v258
        %v489 = vpop.permute.xlu0 %488
        %491 = vset.pattern.permute.xlu0 2
        %492 = vperm.xlu0 %491, %v259
        %v493 = vpop.permute.xlu0 %492
        %495 = vset.pattern.permute.xlu0 2
        %496 = vperm.xlu0 %495, %v260
        %v497 = vpop.permute.xlu0 %496
        %499 = vset.pattern.permute.xlu0 2
        %500 = vperm.xlu0 %499, %v261
        %v501 = vpop.permute.xlu0 %500
        %503 = vset.pattern.permute.xlu0 2
        %504 = vperm.xlu0 %503, %v262
        %v505 = vpop.permute.xlu0 %504
        %507 = vset.pattern.permute.xlu0 2
        %508 = vperm.xlu0 %507, %v263
        %v509 = vpop.permute.xlu0 %508
        %511 = vset.pattern.permute.xlu0 2
        %512 = vperm.xlu0 %511, %v264
        %v513 = vpop.permute.xlu0 %512
        %515 = vset.pattern.permute.xlu0 2
        %516 = vperm.xlu0 %515, %v265
        %v517 = vpop.permute.xlu0 %516
        %519 = vset.pattern.permute.xlu0 2
        %520 = vperm.xlu0 %519, %v266
        %v521 = vpop.permute.xlu0 %520
        %523 = vset.pattern.permute.xlu0 2
        %524 = vperm.xlu0 %523, %v267
        %v525 = vpop.permute.xlu0 %524
        %527 = vset.pattern.permute.xlu0 2
        %528 = vperm.xlu0 %527, %v268
        %v529 = vpop.permute.xlu0 %528
        %531 = vset.pattern.permute.xlu0 2
        %532 = vperm.xlu0 %531, %v269
        %v533 = vpop.permute.xlu0 %532
        %v535 = vlaneseq
        %v536 = vshrl.u32 %v535, 7
        %v537 = vsub.s32 2, %v536
        %v538 = vrot.slane %v270, %v537
        %v539 = vmul.f32 %v473, %v538
        %v540 = vmul.f32 %v477, %v538
        %v541 = vmul.f32 %v481, %v538
        %v542 = vmul.f32 %v485, %v538
        %v543 = vmul.f32 %v489, %v538
        %v544 = vmul.f32 %v493, %v538
        %v545 = vmul.f32 %v497, %v538
        %v546 = vmul.f32 %v501, %v538
        %v547 = vmul.f32 %v505, %v538
        %v548 = vmul.f32 %v509, %v538
        %v549 = vmul.f32 %v513, %v538
        %v550 = vmul.f32 %v517, %v538
        %v551 = vmul.f32 %v521, %v538
        %v552 = vmul.f32 %v525, %v538
        %v553 = vmul.f32 %v529, %v538
        %v554 = vmul.f32 %v533, %v538
        %v555 = vadd.f32 %v455, %v539
        %v556 = vadd.f32 %v456, %v540
        %v557 = vadd.f32 %v457, %v541
        %v558 = vadd.f32 %v458, %v542
        %v559 = vadd.f32 %v459, %v543
        %v560 = vadd.f32 %v460, %v544
        %v561 = vadd.f32 %v461, %v545
        %v562 = vadd.f32 %v462, %v546
        %v563 = vadd.f32 %v463, %v547
        %v564 = vadd.f32 %v464, %v548
        %v565 = vadd.f32 %v465, %v549
        %v566 = vadd.f32 %v466, %v550
        %v567 = vadd.f32 %v467, %v551
        %v568 = vadd.f32 %v468, %v552
        %v569 = vadd.f32 %v469, %v553
        %v570 = vadd.f32 %v470, %v554
        %571 = vset.pattern.permute.xlu0 3
        %572 = vperm.xlu0 %571, %v254
        %v573 = vpop.permute.xlu0 %572
        %575 = vset.pattern.permute.xlu0 3
        %576 = vperm.xlu0 %575, %v255
        %v577 = vpop.permute.xlu0 %576
        %579 = vset.pattern.permute.xlu0 3
        %580 = vperm.xlu0 %579, %v256
        %v581 = vpop.permute.xlu0 %580
        %583 = vset.pattern.permute.xlu0 3
        %584 = vperm.xlu0 %583, %v257
        %v585 = vpop.permute.xlu0 %584
        %587 = vset.pattern.permute.xlu0 3
        %588 = vperm.xlu0 %587, %v258
        %v589 = vpop.permute.xlu0 %588
        %591 = vset.pattern.permute.xlu0 3
        %592 = vperm.xlu0 %591, %v259
        %v593 = vpop.permute.xlu0 %592
        %595 = vset.pattern.permute.xlu0 3
        %596 = vperm.xlu0 %595, %v260
        %v597 = vpop.permute.xlu0 %596
        %599 = vset.pattern.permute.xlu0 3
        %600 = vperm.xlu0 %599, %v261
        %v601 = vpop.permute.xlu0 %600
        %603 = vset.pattern.permute.xlu0 3
        %604 = vperm.xlu0 %603, %v262
        %v605 = vpop.permute.xlu0 %604
        %607 = vset.pattern.permute.xlu0 3
        %608 = vperm.xlu0 %607, %v263
        %v609 = vpop.permute.xlu0 %608
        %611 = vset.pattern.permute.xlu0 3
        %612 = vperm.xlu0 %611, %v264
        %v613 = vpop.permute.xlu0 %612
        %615 = vset.pattern.permute.xlu0 3
        %616 = vperm.xlu0 %615, %v265
        %v617 = vpop.permute.xlu0 %616
        %619 = vset.pattern.permute.xlu0 3
        %620 = vperm.xlu0 %619, %v266
        %v621 = vpop.permute.xlu0 %620
        %623 = vset.pattern.permute.xlu0 3
        %624 = vperm.xlu0 %623, %v267
        %v625 = vpop.permute.xlu0 %624
        %627 = vset.pattern.permute.xlu0 3
        %628 = vperm.xlu0 %627, %v268
        %v629 = vpop.permute.xlu0 %628
        %631 = vset.pattern.permute.xlu0 3
        %632 = vperm.xlu0 %631, %v269
        %v633 = vpop.permute.xlu0 %632
        %v635 = vlaneseq
        %v636 = vshrl.u32 %v635, 7
        %v637 = vsub.s32 3, %v636
        %v638 = vrot.slane %v270, %v637
        %v639 = vmul.f32 %v573, %v638
        %v640 = vmul.f32 %v577, %v638
        %v641 = vmul.f32 %v581, %v638
        %v642 = vmul.f32 %v585, %v638
        %v643 = vmul.f32 %v589, %v638
        %v644 = vmul.f32 %v593, %v638
        %v645 = vmul.f32 %v597, %v638
        %v646 = vmul.f32 %v601, %v638
        %v647 = vmul.f32 %v605, %v638
        %v648 = vmul.f32 %v609, %v638
        %v649 = vmul.f32 %v613, %v638
        %v650 = vmul.f32 %v617, %v638
        %v651 = vmul.f32 %v621, %v638
        %v652 = vmul.f32 %v625, %v638
        %v653 = vmul.f32 %v629, %v638
        %v654 = vmul.f32 %v633, %v638
        %v655 = vadd.f32 %v555, %v639
        %v656 = vadd.f32 %v556, %v640
        %v657 = vadd.f32 %v557, %v641
        %v658 = vadd.f32 %v558, %v642
        %v659 = vadd.f32 %v559, %v643
        %v660 = vadd.f32 %v560, %v644
        %v661 = vadd.f32 %v561, %v645
        %v662 = vadd.f32 %v562, %v646
        %v663 = vadd.f32 %v563, %v647
        %v664 = vadd.f32 %v564, %v648
        %v665 = vadd.f32 %v565, %v649
        %v666 = vadd.f32 %v566, %v650
        %v667 = vadd.f32 %v567, %v651
        %v668 = vadd.f32 %v568, %v652
        %v669 = vadd.f32 %v569, %v653
        %v670 = vadd.f32 %v570, %v654
        %v671 = vpack.c.bf16 %v656, %v655
        %v672 = vpack.c.bf16 %v658, %v657
        %v673 = vpack.c.bf16 %v660, %v659
        %v674 = vpack.c.bf16 %v662, %v661
        %v675 = vpack.c.bf16 %v664, %v663
        %v676 = vpack.c.bf16 %v666, %v665
        %v677 = vpack.c.bf16 %v668, %v667
        %v678 = vpack.c.bf16 %v670, %v669
        %v679 = vld [vmem:[%s2] sm:$0xff]
        %v680 = vld [vmem:[%s2 + $0x8] sm:$0xff]
        %v681 = vld [vmem:[%s2 + $0x10] sm:$0xff]
        %v682 = vld [vmem:[%s2 + $0x18] sm:$0xff]
        %v683 = vld [vmem:[%s2 + $0x20] sm:$0xff]
        %v684 = vld [vmem:[%s2 + $0x28] sm:$0xff]
        %v685 = vld [vmem:[%s2 + $0x30] sm:$0xff]
        %v686 = vld [vmem:[%s2 + $0x38] sm:$0xff]
        %v687 = vld [vmem:[%s2 + $0x40] sm:$0xff]
        %v688 = vld [vmem:[%s2 + $0x48] sm:$0xff]
        %v689 = vld [vmem:[%s2 + $0x50] sm:$0xff]
        %v690 = vld [vmem:[%s2 + $0x58] sm:$0xff]
        %v691 = vld [vmem:[%s2 + $0x60] sm:$0xff]
        %v692 = vld [vmem:[%s2 + $0x68] sm:$0xff]
        %v693 = vld [vmem:[%s2 + $0x70] sm:$0xff]
        %v694 = vld [vmem:[%s2 + $0x78] sm:$0xff]
        %v695 = vld [vmem:[%s3] sm:$0x3]
        %v697 = vlaneseq
        %v698 = vshrl.u32 %v697, 7
        %v699 = vsub.s32 0, %v698
        %v700 = vrot.slane %v695, %v699
        %v701 = vlaneseq
        %v702 = vshrl.u32 %v701, 7
        %v703 = vsub.s32 1, %v702
        %v704 = vrot.slane %v695, %v703
        %v723 = vunpack.c.l.b16 %v679
        %v724 = vunpack.c.h.b16 %v679
        %v725 = vunpack.c.l.b16 %v680
        %v726 = vunpack.c.h.b16 %v680
        %v727 = vunpack.c.l.b16 %v681
        %v728 = vunpack.c.h.b16 %v681
        %v729 = vunpack.c.l.b16 %v682
        %v730 = vunpack.c.h.b16 %v682
        %v731 = vunpack.c.l.b16 %v683
        %v732 = vunpack.c.h.b16 %v683
        %v733 = vunpack.c.l.b16 %v684
        %v734 = vunpack.c.h.b16 %v684
        %v735 = vunpack.c.l.b16 %v685
        %v736 = vunpack.c.h.b16 %v685
        %v737 = vunpack.c.l.b16 %v686
        %v738 = vunpack.c.h.b16 %v686
        %v739 = vunpack.c.l.b16 %v687
        %v740 = vunpack.c.h.b16 %v687
        %v741 = vunpack.c.l.b16 %v688
        %v742 = vunpack.c.h.b16 %v688
        %v743 = vunpack.c.l.b16 %v689
        %v744 = vunpack.c.h.b16 %v689
        %v745 = vunpack.c.l.b16 %v690
        %v746 = vunpack.c.h.b16 %v690
        %v747 = vunpack.c.l.b16 %v691
        %v748 = vunpack.c.h.b16 %v691
        %v749 = vunpack.c.l.b16 %v692
        %v750 = vunpack.c.h.b16 %v692
        %v751 = vunpack.c.l.b16 %v693
        %v752 = vunpack.c.h.b16 %v693
        %v753 = vunpack.c.l.b16 %v694
        %v754 = vunpack.c.h.b16 %v694
        %v755 = vpack.c.b16 %v725, %v723
        %v756 = vpack.c.b16 %v726, %v724
        %v757 = vpack.c.b16 %v729, %v727
        %v758 = vpack.c.b16 %v730, %v728
        %v759 = vpack.c.b16 %v733, %v731
        %v760 = vpack.c.b16 %v734, %v732
        %v761 = vpack.c.b16 %v737, %v735
        %v762 = vpack.c.b16 %v738, %v736
        %v763 = vpack.c.b16 %v741, %v739
        %v764 = vpack.c.b16 %v742, %v740
        %v765 = vpack.c.b16 %v745, %v743
        %v766 = vpack.c.b16 %v746, %v744
        %v767 = vpack.c.b16 %v749, %v747
        %v768 = vpack.c.b16 %v750, %v748
        %v769 = vpack.c.b16 %v753, %v751
        %v770 = vpack.c.b16 %v754, %v752
        %787 = vmatprep.subr.bf16.mxu0 %v756
        %788 = vmatpush1.bf16.msra.mxu0 %v755
        %789 = vmatprep.subr.bf16.mxu0 %v758
        %790 = vmatpush1.bf16.msra.mxu0 %v757
        %791 = vmatprep.subr.bf16.mxu0 %v760
        %792 = vmatpush1.bf16.msra.mxu0 %v759
        %793 = vmatprep.subr.bf16.mxu0 %v762
        %794 = vmatpush1.bf16.msra.mxu0 %v761
        %795 = vmatprep.subr.bf16.mxu0 %v764
        %796 = vmatpush1.bf16.msra.mxu0 %v763
        %797 = vmatprep.subr.bf16.mxu0 %v766
        %798 = vmatpush1.bf16.msra.mxu0 %v765
        %799 = vmatprep.subr.bf16.mxu0 %v768
        %800 = vmatpush1.bf16.msra.mxu0 %v767
        %801 = vmatprep.subr.bf16.mxu0 %v770
        %802 = vmatpush1.bf16.msra.mxu0 %v769
        %803 = vmatprep.subr.bf16.mxu0 0
        %804 = vmatpush1.bf16.msra.mxu0 0
        %805 = vmatprep.subr.bf16.mxu0 0
        %806 = vmatpush1.bf16.msra.mxu0 0
        %807 = vmatprep.subr.bf16.mxu0 0
        %808 = vmatpush1.bf16.msra.mxu0 0
        %809 = vmatprep.subr.bf16.mxu0 0
        %810 = vmatpush1.bf16.msra.mxu0 0
        %811 = vmatprep.subr.bf16.mxu0 0
        %812 = vmatpush1.bf16.msra.mxu0 0
        %813 = vmatprep.subr.bf16.mxu0 0
        %814 = vmatpush1.bf16.msra.mxu0 0
        %815 = vmatprep.subr.bf16.mxu0 0
        %816 = vmatpush1.bf16.msra.mxu0 0
        %817 = vmatprep.subr.bf16.mxu0 0
        %818 = vmatpush1.bf16.msra.mxu0 0
        %819 = vmatprep.mubr.bf16.mxu0 0
        %820 = vmatmul.mubr.bf16.gmra.mrb[0].mxu0 %v671
        %v821 = vpop.f32.mrb[0].mxu0
        %v822 = vadd.f32 %v700, %v821
        %v823 = vpop.f32.mrb[0].mxu0
        %v824 = vadd.f32 %v704, %v823
        %v825 = vpop.f32.mrb[0].mxu0
        %v826 = vadd.f32 %v700, %v825
        %v827 = vpop.f32.mrb[0].mxu0
        %v828 = vadd.f32 %v704, %v827
        %829 = vmatprep.mubr.bf16.mxu0 0
        %830 = vmatmul.mubr.bf16.gmra.mrb[0].mxu0 %v672
        %v831 = vpop.f32.mrb[0].mxu0
        %v832 = vadd.f32 %v700, %v831
        %v833 = vpop.f32.mrb[0].mxu0
        %v834 = vadd.f32 %v704, %v833
        %v835 = vpop.f32.mrb[0].mxu0
        %v836 = vadd.f32 %v700, %v835
        %v837 = vpop.f32.mrb[0].mxu0
        %v838 = vadd.f32 %v704, %v837
        %839 = vmatprep.mubr.bf16.mxu0 0
        %840 = vmatmul.mubr.bf16.gmra.mrb[0].mxu0 %v673
        %v841 = vpop.f32.mrb[0].mxu0
        %v842 = vadd.f32 %v700, %v841
        %v843 = vpop.f32.mrb[0].mxu0
        %v844 = vadd.f32 %v704, %v843
        %v845 = vpop.f32.mrb[0].mxu0
        %v846 = vadd.f32 %v700, %v845
        %v847 = vpop.f32.mrb[0].mxu0
        %v848 = vadd.f32 %v704, %v847
        %849 = vmatprep.mubr.bf16.mxu0 0
        %850 = vmatmul.mubr.bf16.gmra.mrb[0].mxu0 %v674
        %v851 = vpop.f32.mrb[0].mxu0
        %v852 = vadd.f32 %v700, %v851
        %v853 = vpop.f32.mrb[0].mxu0
        %v854 = vadd.f32 %v704, %v853
        %v855 = vpop.f32.mrb[0].mxu0
        %v856 = vadd.f32 %v700, %v855
        %v857 = vpop.f32.mrb[0].mxu0
        %v858 = vadd.f32 %v704, %v857
        %859 = vmatprep.mubr.bf16.mxu0 0
        %860 = vmatmul.mubr.bf16.gmra.mrb[0].mxu0 %v675
        %v861 = vpop.f32.mrb[0].mxu0
        %v862 = vadd.f32 %v700, %v861
        %v863 = vpop.f32.mrb[0].mxu0
        %v864 = vadd.f32 %v704, %v863
        %v865 = vpop.f32.mrb[0].mxu0
        %v866 = vadd.f32 %v700, %v865
        %v867 = vpop.f32.mrb[0].mxu0
        %v868 = vadd.f32 %v704, %v867
        %869 = vmatprep.mubr.bf16.mxu0 0
        %870 = vmatmul.mubr.bf16.gmra.mrb[0].mxu0 %v676
        %v871 = vpop.f32.mrb[0].mxu0
        %v872 = vadd.f32 %v700, %v871
        %v873 = vpop.f32.mrb[0].mxu0
        %v874 = vadd.f32 %v704, %v873
        %v875 = vpop.f32.mrb[0].mxu0
        %v876 = vadd.f32 %v700, %v875
        %v877 = vpop.f32.mrb[0].mxu0
        %v878 = vadd.f32 %v704, %v877
        %879 = vmatprep.mubr.bf16.mxu0 0
        %880 = vmatmul.mubr.bf16.gmra.mrb[0].mxu0 %v677
        %v881 = vpop.f32.mrb[0].mxu0
        %v882 = vadd.f32 %v700, %v881
        %v883 = vpop.f32.mrb[0].mxu0
        %v884 = vadd.f32 %v704, %v883
        %v885 = vpop.f32.mrb[0].mxu0
        %v886 = vadd.f32 %v700, %v885
        %v887 = vpop.f32.mrb[0].mxu0
        %v888 = vadd.f32 %v704, %v887
        %889 = vmatprep.mubr.bf16.mxu0 0
        %890 = vmatmul.mubr.bf16.gmra.mrb[0].mxu0 %v678
        %v891 = vpop.f32.mrb[0].mxu0
        %v892 = vadd.f32 %v700, %v891
        %v893 = vpop.f32.mrb[0].mxu0
        %v894 = vadd.f32 %v704, %v893
        %v895 = vpop.f32.mrb[0].mxu0
        %v896 = vadd.f32 %v700, %v895
        %v897 = vpop.f32.mrb[0].mxu0
        %v898 = vadd.f32 %v704, %v897
        %899 = vdwg.mxu0
        %v900 = vmax.f32 %v822, 0.0
        %v901 = vmax.f32 %v826, 0.0
        %v902 = vmax.f32 %v832, 0.0
        %v903 = vmax.f32 %v836, 0.0
        %v904 = vmax.f32 %v842, 0.0
        %v905 = vmax.f32 %v846, 0.0
        %v906 = vmax.f32 %v852, 0.0
        %v907 = vmax.f32 %v856, 0.0
        %v908 = vmax.f32 %v862, 0.0
        %v909 = vmax.f32 %v866, 0.0
        %v910 = vmax.f32 %v872, 0.0
        %v911 = vmax.f32 %v876, 0.0
        %v912 = vmax.f32 %v882, 0.0
        %v913 = vmax.f32 %v886, 0.0
        %v914 = vmax.f32 %v892, 0.0
        %v915 = vmax.f32 %v896, 0.0
        %v916 = vadd.f32 %v900, %v824
        %v917 = vadd.f32 %v901, %v828
        %v918 = vadd.f32 %v902, %v834
        %v919 = vadd.f32 %v903, %v838
        %v920 = vadd.f32 %v904, %v844
        %v921 = vadd.f32 %v905, %v848
        %v922 = vadd.f32 %v906, %v854
        %v923 = vadd.f32 %v907, %v858
        %v924 = vadd.f32 %v908, %v864
        %v925 = vadd.f32 %v909, %v868
        %v926 = vadd.f32 %v910, %v874
        %v927 = vadd.f32 %v911, %v878
        %v928 = vadd.f32 %v912, %v884
        %v929 = vadd.f32 %v913, %v888
        %v930 = vadd.f32 %v914, %v894
        %v931 = vadd.f32 %v915, %v898
        %v932 = vpack.c.bf16 %v917, %v916
        %v933 = vpack.c.bf16 %v919, %v918
        %v934 = vpack.c.bf16 %v921, %v920
        %v935 = vpack.c.bf16 %v923, %v922
        %v936 = vpack.c.bf16 %v925, %v924
        %v937 = vpack.c.bf16 %v927, %v926
        %v938 = vpack.c.bf16 %v929, %v928
        %v939 = vpack.c.bf16 %v931, %v930
        %v940 = vld [vmem:[%s4] sm:$0xf]
        %v941 = vld [vmem:[%s4 + $0x4] sm:$0xf]
        %v942 = vld [vmem:[%s4 + $0x8] sm:$0xf]
        %v943 = vld [vmem:[%s4 + $0xc] sm:$0xf]
        %v944 = vld [vmem:[%s4 + $0x10] sm:$0xf]
        %v945 = vld [vmem:[%s4 + $0x14] sm:$0xf]
        %v946 = vld [vmem:[%s4 + $0x18] sm:$0xf]
        %v947 = vld [vmem:[%s4 + $0x1c] sm:$0xf]
        %v948 = vld [vmem:[%s4 + $0x20] sm:$0xf]
        %v949 = vld [vmem:[%s4 + $0x24] sm:$0xf]
        %v950 = vld [vmem:[%s4 + $0x28] sm:$0xf]
        %v951 = vld [vmem:[%s4 + $0x2c] sm:$0xf]
        %v952 = vld [vmem:[%s4 + $0x30] sm:$0xf]
        %v953 = vld [vmem:[%s4 + $0x34] sm:$0xf]
        %v954 = vld [vmem:[%s4 + $0x38] sm:$0xf]
        %v955 = vld [vmem:[%s4 + $0x3c] sm:$0xf]
        %v956 = vld [vmem:[%s5] sm:$0x1]
        %v958 = vlaneseq
        %v959 = vshrl.u32 %v958, 7
        %v960 = vsub.s32 0, %v959
        %v961 = vrot.slane %v956, %v960
        %v979 = vunpack.c.l.b16 %v940
        %v980 = vunpack.c.l.b16 %v941
        %v981 = vunpack.c.l.b16 %v942
        %v982 = vunpack.c.l.b16 %v943
        %v983 = vunpack.c.l.b16 %v944
        %v984 = vunpack.c.l.b16 %v945
        %v985 = vunpack.c.l.b16 %v946
        %v986 = vunpack.c.l.b16 %v947
        %v987 = vunpack.c.l.b16 %v948
        %v988 = vunpack.c.l.b16 %v949
        %v989 = vunpack.c.l.b16 %v950
        %v990 = vunpack.c.l.b16 %v951
        %v991 = vunpack.c.l.b16 %v952
        %v992 = vunpack.c.l.b16 %v953
        %v993 = vunpack.c.l.b16 %v954
        %v994 = vunpack.c.l.b16 %v955
        %v995 = vpack.c.b16 %v980, %v979
        %v996 = vpack.c.b16 %v982, %v981
        %v997 = vpack.c.b16 %v984, %v983
        %v998 = vpack.c.b16 %v986, %v985
        %v999 = vpack.c.b16 %v988, %v987
        %v1000 = vpack.c.b16 %v990, %v989
        %v1001 = vpack.c.b16 %v992, %v991
        %v1002 = vpack.c.b16 %v994, %v993
        %1011 = vmatprep.subr.bf16.mxu0 0
        %1012 = vmatpush1.bf16.msra.mxu0 %v995
        %1013 = vmatprep.subr.bf16.mxu0 0
        %1014 = vmatpush1.bf16.msra.mxu0 %v996
        %1015 = vmatprep.subr.bf16.mxu0 0
        %1016 = vmatpush1.bf16.msra.mxu0 %v997
        %1017 = vmatprep.subr.bf16.mxu0 0
        %1018 = vmatpush1.bf16.msra.mxu0 %v998
        %1019 = vmatprep.subr.bf16.mxu0 0
        %1020 = vmatpush1.bf16.msra.mxu0 %v999
        %1021 = vmatprep.subr.bf16.mxu0 0
        %1022 = vmatpush1.bf16.msra.mxu0 %v1000
        %1023 = vmatprep.subr.bf16.mxu0 0
        %1024 = vmatpush1.bf16.msra.mxu0 %v1001
        %1025 = vmatprep.subr.bf16.mxu0 0
        %1026 = vmatpush1.bf16.msra.mxu0 %v1002
        %1027 = vmatprep.subr.bf16.mxu0 0
        %1028 = vmatpush1.bf16.msra.mxu0 0
        %1029 = vmatprep.subr.bf16.mxu0 0
        %1030 = vmatpush1.bf16.msra.mxu0 0
        %1031 = vmatprep.subr.bf16.mxu0 0
        %1032 = vmatpush1.bf16.msra.mxu0 0
        %1033 = vmatprep.subr.bf16.mxu0 0
        %1034 = vmatpush1.bf16.msra.mxu0 0
        %1035 = vmatprep.subr.bf16.mxu0 0
        %1036 = vmatpush1.bf16.msra.mxu0 0
        %1037 = vmatprep.subr.bf16.mxu0 0
        %1038 = vmatpush1.bf16.msra.mxu0 0
        %1039 = vmatprep.subr.bf16.mxu0 0
        %1040 = vmatpush1.bf16.msra.mxu0 0
        %1041 = vmatprep.subr.bf16.mxu0 0
        %1042 = vmatpush1.bf16.msra.mxu0 0
        %1043 = vmatprep.mubr.bf16.mxu0 0
        %1044 = vmatmul.mubr.bf16.gmra.mrb[0].mxu0 %v932
        %v1045 = vpop.f32.mrb[0].mxu0
        %v1046 = vadd.f32 %v961, %v1045
        %v1047 = vpop.f32.mrb[0].mxu0
        %v1048 = vpop.f32.mrb[0].mxu0
        %v1049 = vadd.f32 %v961, %v1048
        %v1050 = vpop.f32.mrb[0].mxu0
        %1051 = vmatprep.mubr.bf16.mxu0 0
        %1052 = vmatmul.mubr.bf16.gmra.mrb[0].mxu0 %v933
        %v1053 = vpop.f32.mrb[0].mxu0
        %v1054 = vadd.f32 %v961, %v1053
        %v1055 = vpop.f32.mrb[0].mxu0
        %v1056 = vpop.f32.mrb[0].mxu0
        %v1057 = vadd.f32 %v961, %v1056
        %v1058 = vpop.f32.mrb[0].mxu0
        %1059 = vmatprep.mubr.bf16.mxu0 0
        %1060 = vmatmul.mubr.bf16.gmra.mrb[0].mxu0 %v934
        %v1061 = vpop.f32.mrb[0].mxu0
        %v1062 = vadd.f32 %v961, %v1061
        %v1063 = vpop.f32.mrb[0].mxu0
        %v1064 = vpop.f32.mrb[0].mxu0
        %v1065 = vadd.f32 %v961, %v1064
        %v1066 = vpop.f32.mrb[0].mxu0
        %1067 = vmatprep.mubr.bf16.mxu0 0
        %1068 = vmatmul.mubr.bf16.gmra.mrb[0].mxu0 %v935
        %v1069 = vpop.f32.mrb[0].mxu0
        %v1070 = vadd.f32 %v961, %v1069
        %v1071 = vpop.f32.mrb[0].mxu0
        %v1072 = vpop.f32.mrb[0].mxu0
        %v1073 = vadd.f32 %v961, %v1072
        %v1074 = vpop.f32.mrb[0].mxu0
        %1075 = vmatprep.mubr.bf16.mxu0 0
        %1076 = vmatmul.mubr.bf16.gmra.mrb[0].mxu0 %v936
        %v1077 = vpop.f32.mrb[0].mxu0
        %v1078 = vadd.f32 %v961, %v1077
        %v1079 = vpop.f32.mrb[0].mxu0
        %v1080 = vpop.f32.mrb[0].mxu0
        %v1081 = vadd.f32 %v961, %v1080
        %v1082 = vpop.f32.mrb[0].mxu0
        %1083 = vmatprep.mubr.bf16.mxu0 0
        %1084 = vmatmul.mubr.bf16.gmra.mrb[0].mxu0 %v937
        %v1085 = vpop.f32.mrb[0].mxu0
        %v1086 = vadd.f32 %v961, %v1085
        %v1087 = vpop.f32.mrb[0].mxu0
        %v1088 = vpop.f32.mrb[0].mxu0
        %v1089 = vadd.f32 %v961, %v1088
        %v1090 = vpop.f32.mrb[0].mxu0
        %1091 = vmatprep.mubr.bf16.mxu0 0
        %1092 = vmatmul.mubr.bf16.gmra.mrb[0].mxu0 %v938
        %v1093 = vpop.f32.mrb[0].mxu0
        %v1094 = vadd.f32 %v961, %v1093
        %v1095 = vpop.f32.mrb[0].mxu0
        %v1096 = vpop.f32.mrb[0].mxu0
        %v1097 = vadd.f32 %v961, %v1096
        %v1098 = vpop.f32.mrb[0].mxu0
        %1099 = vmatprep.mubr.bf16.mxu0 0
        %1100 = vmatmul.mubr.bf16.gmra.mrb[0].mxu0 %v939
        %v1101 = vpop.f32.mrb[0].mxu0
        %v1102 = vadd.f32 %v961, %v1101
        %v1103 = vpop.f32.mrb[0].mxu0
        %v1104 = vpop.f32.mrb[0].mxu0
        %v1105 = vadd.f32 %v961, %v1104
        %v1106 = vpop.f32.mrb[0].mxu0
        %1107 = vdwg.mxu0
        %1108 = vst [vmem:[%s245] sm:$0xff] %v1046
        %1109 = vst [vmem:[%s245 + $0x8] sm:$0xff] %v1049
        %1110 = vst [vmem:[%s245 + $0x10] sm:$0xff] %v1054
        %1111 = vst [vmem:[%s245 + $0x18] sm:$0xff] %v1057
        %1112 = vst [vmem:[%s245 + $0x20] sm:$0xff] %v1062
        %1113 = vst [vmem:[%s245 + $0x28] sm:$0xff] %v1065
        %1114 = vst [vmem:[%s245 + $0x30] sm:$0xff] %v1070
        %1115 = vst [vmem:[%s245 + $0x38] sm:$0xff] %v1073
        %1116 = vst [vmem:[%s245 + $0x40] sm:$0xff] %v1078
        %1117 = vst [vmem:[%s245 + $0x48] sm:$0xff] %v1081
        %1118 = vst [vmem:[%s245 + $0x50] sm:$0xff] %v1086
        %1119 = vst [vmem:[%s245 + $0x58] sm:$0xff] %v1089
        %1120 = vst [vmem:[%s245 + $0x60] sm:$0xff] %v1094
        %1121 = vst [vmem:[%s245 + $0x68] sm:$0xff] %v1097
        %1122 = vst [vmem:[%s245 + $0x70] sm:$0xff] %v1102
        %1123 = vst [vmem:[%s245 + $0x78] sm:$0xff] %v1105
        %s1124 = sand.u32 %s159, 1
        %s1125 = scalar_lea.sflag [#allocation3], %s1124
        %s1126 = sand.u32 %s159, 1
        %s1127 = smul.addr %s1126, 128
        %s1128 = scalar_lea.vmem [#allocation2], %s1127
        // Predicated region
        $region45: #{blockgen_forward.1} parent=43 // pred_check
          %p1129 = pneg %p169
        $region46: #{blockgen_forward.1} parent=43 // pred_check_branch
          %1131 = sbr.rel (%p1129) target = $region48
        $region47: #{blockgen_forward.1} parent=43 // pred_region
          %s1132 = smul.u32 16, %s20
          %s1134 = ssub.s32 2048, 2048
          %1135 = vsyncadd %s1125, %s1134
          %s1136 = smul.addr %s1132, 128
          %s1137 = scalar_lea.hbm %s6, %s1136
          %s1138 = sshll.u32 %s1128, 4
          %s1139 = int_to_ptr.vmem [resolvable:$true] %s1138
          %1144 = dma.vmem_to_hbm [thread:$0]  %s1139, 2048, %s1137, %s1125, 128, 128, 8
        $region48: #{blockgen_forward.1} parent=43 // pred_fallthru
          _
      $region44: #{blockgen_forward.1} parent=5 // pred_fallthru
        _
      %p1145 = scmp.le.s32.totalorder 2, %s15
      // Predicated region
      $region49: #{blockgen_forward.1} parent=5 // pred_check
        %p1146 = pneg %p1145
      $region50: #{blockgen_forward.1} parent=5 // pred_check_branch
        %1148 = sbr.rel (%p1146) target = $region52
      $region51: #{blockgen_forward.1} parent=5 // pred_region
        %s1149 = ssub.s32 %s15, 2
        // Predicated region
        $region53: #{blockgen_forward.1} parent=51 // pred_check
          %p1150 = pneg %p175
        $region54: #{blockgen_forward.1} parent=51 // pred_check_branch
          %1152 = sbr.rel (%p1150) target = $region56
        $region55: #{blockgen_forward.1} parent=51 // pred_region
          %s1153 = sand.u32 %s160, 1
          %s1154 = scalar_lea.sflag [#allocation3], %s1153
          %s1155 = sand.u32 %s160, 1
          %s1156 = smul.addr %s1155, 128
          %s1157 = scalar_lea.vmem [#allocation2], %s1156
          %1158 = dma.done %s1154, 2048
        $region56: #{blockgen_forward.1} parent=51 // pred_fallthru
          _
      $region52: #{blockgen_forward.1} parent=5 // pred_fallthru
        _
    $region6: #{blockgen_forward.1} parent=1 // loop_footer
      %s19 = sadd.s32 1, %s15
    $region7: #{blockgen_forward.1} parent=1 // loop_footer_branch
      %14 = sbr.rel target = $region3
    $region8: #{blockgen_forward.1} parent=1 // loop_exit
      _
    %1159 = vsyncpa [#allocation3], 1
    %s1160 = scalar_lea.sflag [#allocation3], 1
    %1161 = vsyncpa %s1160, 1

</llo_original>
